<compile_context>
chip_gen: v6e
topology: v6e:2x2x1
jax: 0.10.0
libtpu: 0.0.40
codegen_flags: <defaults>
</compile_context>

<pallas_src>
import functools

import jax
import jax.numpy as jnp
from jax.experimental import pallas as pl
from jax.experimental.pallas import tpu as pltpu

_LANES = 128


def cbm_kernel(x_ref, w_ref, b_ref, o_ref):
    # x_ref: (TB, D) f32, w_ref: (D, Cp) bf16, b_ref: (1, Cp) f32, o_ref: (TB, Cp) f32
    # In-kernel bf16 cast of x: avoids a separate wrapper astype pass over HBM.
    x_bf16 = x_ref[...].astype(jnp.bfloat16)
    logits = jnp.dot(x_bf16, w_ref[...], preferred_element_type=jnp.float32)
    logits = logits + b_ref[...]  # broadcast (1, Cp) -> (TB, Cp), f32
    # Numerically-stable softmax over the concept axis. Padding columns have
    # bias -1e30 -> exp underflows to exactly 0, so real concepts are unchanged.
    m = jnp.max(logits, axis=-1, keepdims=True)
    e = jnp.exp(logits - m)
    denom = jnp.sum(e, axis=-1, keepdims=True)
    o_ref[...] = (e * pl.reciprocal(denom, approx=True)).astype(o_ref.dtype)


def _round_up(n, m):
    return ((n + m - 1) // m) * m


def _vmem_limit_bytes():
    """Generation-aware VMEM limit: ~85% of capacity, capped at 112 MiB."""
    try:
        info = pltpu.get_tpu_info()
        cap = int(getattr(info, "vmem_capacity_bytes", 64 * 1024 * 1024))
    except Exception:  # fallback if query unsupported on this jax/runtime
        cap = 64 * 1024 * 1024
    return max(32 * 1024 * 1024, min(int(cap * 0.85), 112 * 1024 * 1024))


def _choose_block_b(B, D, c_pad, vmem_budget):
    """Largest TB whose buffers fit the VMEM budget (direct computation)."""
    # W + bias are "resident" (constant index_map), but the pipeline may still
    # allocate 2 buffers for them -> count them twice for v7x safety.
    resident = 2 * (D * c_pad * 2 + c_pad * 4)          # bf16 W, f32 bias
    per_row = 2 * D * 4 + 2 * c_pad * 4                 # dbl-buffered f32 x + f32 out
    avail = max(vmem_budget - resident, 0)
    tb = avail // per_row
    tb = min(tb, 1024, _round_up(B, 8))
    if tb >= 256:
        tb = (tb // 256) * 256      # full 256-wide MXU LHS tiles (v6e/v7x)
    elif tb >= 16:
        tb = (tb // 16) * 16        # bf16 sublane-pack friendly
    else:
        tb = 8
    return max(tb, 8)


def prepare_cbm_params(w, b):
    """One-time weight prep (module init): pad concept axis to 128 lanes,
    cast W to bf16, pad bias with -1e30 so padded columns softmax to 0."""
    D, C = w.shape
    c_pad = _round_up(C, _LANES)
    if c_pad != C:
        w = jnp.pad(w, ((0, 0), (0, c_pad - C)))
        b = jnp.pad(b, (0, c_pad - C), constant_values=-1e30)
    w_p = w.astype(jnp.bfloat16)
    b_p = b.reshape(1, c_pad).astype(jnp.float32)
    return w_p, b_p


@functools.partial(jax.jit, static_argnames=("num_concepts",))
def cbm_forward(x, w_p, b_p, *, num_concepts):
    """x: (B, D) f32; w_p: (D, c_pad) bf16; b_p: (1, c_pad) f32 (from
    prepare_cbm_params). Returns softmax(x @ w + b) of shape (B, num_concepts)."""
    B, D = x.shape
    c_pad = w_p.shape[1]

    vmem_limit = _vmem_limit_bytes()
    tb = _choose_block_b(B, D, c_pad, vmem_budget=vmem_limit // 2)
    # Ensure >= 2 grid steps when B is large enough so the "parallel" batch
    # axis actually splits work across v7x's two TensorCores.
    if pl.cdiv(B, tb) == 1 and B >= 32:
        tb = min(tb, _round_up((B + 1) // 2, 16))
    nb = pl.cdiv(B, tb)
    # Note: if B % tb != 0 the last block's padded rows hold unspecified data;
    # softmax is per-row so valid rows are unaffected and padded rows are
    # clipped on writeback.

    cost = pl.CostEstimate(
        flops=2 * B * D * c_pad,
        transcendentals=B * c_pad,
        bytes_accessed=(B * D * 4 + D * c_pad * 2 + c_pad * 4 + B * c_pad * 4),
    )

    out_padded = pl.pallas_call(
        cbm_kernel,
        out_shape=jax.ShapeDtypeStruct((B, c_pad), jnp.float32),
        grid_spec=pl.GridSpec(
            grid=(nb,),
            in_specs=[
                pl.BlockSpec((tb, D), lambda i: (i, 0)),       # x tile, pipelined
                pl.BlockSpec((D, c_pad), lambda i: (0, 0)),    # W resident in VMEM
                pl.BlockSpec((1, c_pad), lambda i: (0, 0)),    # bias resident in VMEM
            ],
            out_specs=pl.BlockSpec((tb, c_pad), lambda i: (i, 0)),
        ),
        compiler_params=pltpu.CompilerParams(
            dimension_semantics=("parallel",),   # independent batch tiles
            vmem_limit_bytes=vmem_limit,
        ),
        cost_estimate=cost,
    )(x, w_p, b_p)

    if c_pad == num_concepts:
        return out_padded
    # TODO(synk): for lane-unaligned C, the consumer could accept the padded
    # (B, c_pad) array (pad columns are exactly 0) to avoid this slice pass.
    return out_padded[:, :num_concepts]


def reference(x, w, b):
    logits = x @ w + b
    logits = logits - jnp.max(logits, axis=1, keepdims=True)
    e = jnp.exp(logits)
    return e / jnp.sum(e, axis=1, keepdims=True)


if __name__ == "__main__":
    # Small shapes consistent with the module: batch=8, input_dim=32, num_concepts=16.
    B, D, C = 8, 32, 16
    key = jax.random.PRNGKey(0)
    kx, kw, kb = jax.random.split(key, 3)

    x = jax.random.normal(kx, (B, D), dtype=jnp.float32)
    # nn.Linear-style init: U(-1/sqrt(D), 1/sqrt(D))
    bound = 1.0 / jnp.sqrt(jnp.float32(D))
    w = jax.random.uniform(kw, (D, C), minval=-bound, maxval=bound, dtype=jnp.float32)
    b = jax.random.uniform(kb, (C,), minval=-bound, maxval=bound, dtype=jnp.float32)

    # One-time param prep (pad + bf16 cast), then the Pallas forward.
    w_p, b_p = prepare_cbm_params(w, b)
    out = cbm_forward(x, w_p, b_p, num_concepts=C)
    jax.block_until_ready(out)

    ref = reference(x, w, b)
    assert out.shape == (B, C)
    # bf16 matmul inputs + approx reciprocal -> loose-but-safe tolerance vs f32 ref.
    assert jnp.allclose(out, ref, atol=2e-2, rtol=2e-2), "mismatch vs reference"
    # rows of softmax sum to 1 (padding columns contribute exactly 0)
    assert jnp.allclose(jnp.sum(out, axis=1), jnp.ones((B,)), atol=1e-2)

    print("KERNEL_OK")
</pallas_src>

<mosaic_0001>
module attributes {stable_mosaic.version = 11 : i64} {
  func.func @cbm_kernel(%arg0: i32, %arg1: memref<8x32xf32, #tpu.memory_space<vmem>>, %arg2: memref<32x128xbf16, #tpu.memory_space<vmem>>, %arg3: memref<1x128xf32, #tpu.memory_space<vmem>>, %arg4: memref<8x128xf32, #tpu.memory_space<vmem>>) attributes {dimension_semantics = [#tpu.dimension_semantics<parallel>], iteration_bounds = array<i64: 1>, scalar_prefetch = 0 : i64, scratch_operands = 0 : i64, tpu.core_type = #tpu.core_type<tc>, window_params = [{transform_indices = @transform_0, window_bounds = array<i64: 8, 32>}, {pipeline_mode = #tpu.pipeline_mode<synchronous>, transform_indices = @transform_1, window_bounds = array<i64: 32, 128>}, {pipeline_mode = #tpu.pipeline_mode<synchronous>, transform_indices = @transform_2, window_bounds = array<i64: 1, 128>}, {transform_indices = @transform_3, window_bounds = array<i64: 8, 128>}]} {
    %c0 = arith.constant 0 : index
    %c0_0 = arith.constant 0 : index
    %0 = vector.load %arg1[%c0, %c0_0] : memref<8x32xf32, #tpu.memory_space<vmem>>, vector<8x32xf32>
    %1 = arith.truncf %0 : vector<8x32xf32> to vector<8x32xbf16>
    %c0_1 = arith.constant 0 : index
    %c0_2 = arith.constant 0 : index
    %2 = vector.load %arg2[%c0_1, %c0_2] : memref<32x128xbf16, #tpu.memory_space<vmem>>, vector<32x128xbf16>
    %cst = arith.constant dense<0.000000e+00> : vector<8x128xf32>
    %3 = tpu.matmul %1, %2, %cst {dimension_numbers = #tpu.dot_dimension_numbers<[1], [0], [0], [1], [0, 0, 1, 1], [], []>} : vector<8x32xbf16>, vector<32x128xbf16>, vector<8x128xf32> -> vector<8x128xf32>
    %c0_3 = arith.constant 0 : index
    %c0_4 = arith.constant 0 : index
    %4 = vector.load %arg3[%c0_3, %c0_4] : memref<1x128xf32, #tpu.memory_space<vmem>>, vector<1x128xf32>
    %5 = vector.broadcast %4 : vector<1x128xf32> to vector<8x128xf32>
    %6 = arith.addf %3, %5 : vector<8x128xf32>
    %cst_5 = arith.constant dense<0xFF800000> : vector<8xf32>
    %7 = vector.multi_reduction <maximumf>, %6, %cst_5 [1] : vector<8x128xf32> to vector<8xf32>
    %8 = vector.shape_cast %7 : vector<8xf32> to vector<8x1xf32>
    %9 = vector.broadcast %8 : vector<8x1xf32> to vector<8x128xf32>
    %10 = arith.subf %6, %9 : vector<8x128xf32>
    %11 = math.exp %10 : vector<8x128xf32>
    %cst_6 = arith.constant dense<0.000000e+00> : vector<8xf32>
    %12 = vector.multi_reduction <add>, %11, %cst_6 [1] : vector<8x128xf32> to vector<8xf32>
    %13 = vector.shape_cast %12 : vector<8xf32> to vector<8x1xf32>
    %14 = tpu.reciprocal %13 {approx = true} : vector<8x1xf32> -> vector<8x1xf32>
    %15 = vector.broadcast %14 : vector<8x1xf32> to vector<8x128xf32>
    %16 = arith.mulf %11, %15 : vector<8x128xf32>
    %c0_7 = arith.constant 0 : index
    %c0_8 = arith.constant 0 : index
    %17 = vector.load %arg4[%c0_7, %c0_8] : memref<8x128xf32, #tpu.memory_space<vmem>>, vector<8x128xf32>
    tpu.vector_store %arg4[%c0_7, %c0_8], %16 {strides = array<i32>} : memref<8x128xf32, #tpu.memory_space<vmem>>, vector<8x128xf32>,
    return
  }
  func.func @transform_0(%arg0: i32) -> (i32, i32) {
    %c0_i32 = arith.constant 0 : i32
    %c0_i32_0 = arith.constant 0 : i32
    return %arg0, %c0_i32 : i32, i32
  }
  func.func @transform_1(%arg0: i32) -> (i32, i32) {
    %c0_i32 = arith.constant 0 : i32
    %c0_i32_0 = arith.constant 0 : i32
    %c0_i32_1 = arith.constant 0 : i32
    return %c0_i32, %c0_i32_0 : i32, i32
  }
  func.func @transform_2(%arg0: i32) -> (i32, i32) {
    %c0_i32 = arith.constant 0 : i32
    %c0_i32_0 = arith.constant 0 : i32
    %c0_i32_1 = arith.constant 0 : i32
    return %c0_i32, %c0_i32_0 : i32, i32
  }
  func.func @transform_3(%arg0: i32) -> (i32, i32) {
    %c0_i32 = arith.constant 0 : i32
    %c0_i32_0 = arith.constant 0 : i32
    return %arg0, %c0_i32 : i32, i32
  }
}

</mosaic_0001>

<llo_original>
// kernel: cbm_forward.1
$region0: #{cbm_forward.1}
  #allocation0 [shape = 'u32[]', space=smem, size = 0x4, offset = 0x4, fixed_abs, tag = 'smem constant byte address 0x4 - core index']
  #allocation1 [shape = 'u32[144,128]{1,0:T(1,128)}', space=vmem, size = 0x12000, scoped, tag = 'internal scratch']
  %s0 = inlined_call_operand.hbm [shape: f32[8,32], index: 0, kind: input, shape index: {}]
  %s1 = inlined_call_operand.hbm [shape: bf16[32,128], index: 1, kind: input, shape index: {}]
  %s2 = inlined_call_operand.vmem [shape: f32[1,128], index: 2, kind: input, shape index: {}]
  %s3 = inlined_call_operand.hbm [shape: f32[8,128], index: 3, kind: output, shape index: {}]
  %s4 = sld [smem:[#allocation0]]
  $region30: #{cbm_forward.1} parent=0
    _
  %s6 = ssub.s32 1, %s4
  %s7 = scalar_select 0, %s6, %s4
  $region1: #{cbm_forward.1} parent=0
    #allocation2 [shape = 'u8[4096]{0}', space=vmem, size = 0x1000, scoped, tag = 'input window, operand 0, single buffered']
    #allocation3 [shape = 's32[1]{0}', space=sflag, size = 0x4, scoped, tag = 'scoped memory for cbm_forward.1']
    #allocation4 [shape = 's32[1]{0}', space=sflag, size = 0x4, scoped, tag = 'scoped memory for cbm_forward.1']
    #allocation5 [shape = 'u8[8192]{0}', space=vmem, size = 0x2000, scoped, tag = 'input window, operand 1, single buffered']
    #allocation6 [shape = 's32[1]{0}', space=sflag, size = 0x4, scoped, tag = 'scoped memory for cbm_forward.1']
    #allocation7 [shape = 'u8[4096]{0}', space=vmem, size = 0x1000, scoped, tag = 'output window, operand 0, single buffered']
    %8 = vsyncpa [#allocation3], 0
    %9 = vsyncpa [#allocation6], 0
    %10 = vsyncpa [#allocation4], 0
    // Predicated region
    $region2: #{cbm_forward.1} parent=1 // pred_check
      _
    $region3: #{cbm_forward.1} parent=1 // pred_check_branch
      %12 = sbr.rel (0) target = $region5
    $region4: #{cbm_forward.1} parent=1 // pred_region
      %s14 = ssub.s32 128, 128
      %15 = vsyncadd [#allocation3], %s14
      %s17 = sshll.u32 [#allocation2], 4
      %s18 = int_to_ptr.vmem [resolvable:$true] %s17
      %20 = dma.hbm_to_vmem [thread:$0]  %s0, 128, %s18, [#allocation3]
    $region5: #{cbm_forward.1} parent=1 // pred_fallthru
      _
    // Predicated region
    $region6: #{cbm_forward.1} parent=1 // pred_check
      _
    $region7: #{cbm_forward.1} parent=1 // pred_check_branch
      %22 = sbr.rel (0) target = $region9
    $region8: #{cbm_forward.1} parent=1 // pred_region
      %s24 = ssub.s32 256, 256
      %25 = vsyncadd [#allocation6], %s24
      %s26 = sshll.u32 [#allocation5], 4
      %s27 = int_to_ptr.vmem [resolvable:$true] %s26
      %32 = dma.hbm_to_vmem [thread:$0]  %s1, 256, %s27, [#allocation6], 64, 64, 4
    $region9: #{cbm_forward.1} parent=1 // pred_fallthru
      _
    // Predicated region
    $region10: #{cbm_forward.1} parent=1 // pred_check
      _
    $region11: #{cbm_forward.1} parent=1 // pred_check_branch
      %34 = sbr.rel (0) target = $region13
    $region12: #{cbm_forward.1} parent=1 // pred_region
      _
    $region13: #{cbm_forward.1} parent=1 // pred_fallthru
      _
    // Predicated region
    $region14: #{cbm_forward.1} parent=1 // pred_check
      _
    $region15: #{cbm_forward.1} parent=1 // pred_check_branch
      %36 = sbr.rel (0) target = $region17
    $region16: #{cbm_forward.1} parent=1 // pred_region
      %37 = dma.done [#allocation3], 128
    $region17: #{cbm_forward.1} parent=1 // pred_fallthru
      _
    // Predicated region
    $region18: #{cbm_forward.1} parent=1 // pred_check
      _
    $region19: #{cbm_forward.1} parent=1 // pred_check_branch
      %39 = sbr.rel (0) target = $region21
    $region20: #{cbm_forward.1} parent=1 // pred_region
      %40 = dma.done [#allocation6], 256
    $region21: #{cbm_forward.1} parent=1 // pred_fallthru
      _
    %v42 = vld [vmem:[#allocation2] sm:$0xff]
    %v43 = vpack.c.bf16 %v42, %v42
    %v44 = vld [vmem:[#allocation5] sm:$0xf]
    %v45 = vld [vmem:[#allocation5 + $0x4] sm:$0xf]
    %v46 = vld [vmem:[#allocation5 + $0x8] sm:$0xf]
    %v47 = vld [vmem:[#allocation5 + $0xc] sm:$0xf]
    %v48 = vld [vmem:[%s2] sm:$0x1]
    %v50 = vlaneseq
    %v51 = vshrl.u32 %v50, 7
    %v52 = vsub.s32 0, %v51
    %v53 = vrot.slane %v48, %v52
    %v59 = vunpack.c.l.b16 %v44
    %v60 = vunpack.c.l.b16 %v45
    %v61 = vunpack.c.l.b16 %v46
    %v62 = vunpack.c.l.b16 %v47
    %v63 = vpack.c.b16 %v60, %v59
    %v64 = vpack.c.b16 %v62, %v61
    %vm67 = vcmask 261120
    %v69 = vsel %vm67, %v43, 0
    %71 = vmatprep.subr.bf16.mxu0 0
    %72 = vmatpush1.bf16.msra.mxu0 0
    %73 = vmatprep.subr.bf16.mxu0 0
    %74 = vmatpush1.bf16.msra.mxu0 0
    %75 = vmatprep.subr.bf16.mxu0 0
    %76 = vmatpush1.bf16.msra.mxu0 0
    %77 = vmatprep.subr.bf16.mxu0 0
    %78 = vmatpush1.bf16.msra.mxu0 0
    %79 = vmatprep.subr.bf16.mxu0 0
    %80 = vmatpush1.bf16.msra.mxu0 0
    %81 = vmatprep.subr.bf16.mxu0 0
    %82 = vmatpush1.bf16.msra.mxu0 0
    %83 = vmatprep.subr.bf16.mxu0 0
    %84 = vmatpush1.bf16.msra.mxu0 %v64
    %85 = vmatprep.subr.bf16.mxu0 0
    %86 = vmatpush1.bf16.msra.mxu0 %v63
    %87 = vmatprep.subr.bf16.mxu0 0
    %88 = vmatpush2.bf16.msra.mxu0 0
    %89 = vmatprep.subr.bf16.mxu0 0
    %90 = vmatpush2.bf16.msra.mxu0 0
    %91 = vmatprep.subr.bf16.mxu0 0
    %92 = vmatpush2.bf16.msra.mxu0 0
    %93 = vmatprep.subr.bf16.mxu0 0
    %94 = vmatpush2.bf16.msra.mxu0 0
    %95 = vmatprep.subr.bf16.mxu0 0
    %96 = vmatpush2.bf16.msra.mxu0 0
    %97 = vmatprep.subr.bf16.mxu0 0
    %98 = vmatpush2.bf16.msra.mxu0 0
    %99 = vmatprep.subr.bf16.mxu0 0
    %100 = vmatpush2.bf16.msra.mxu0 0
    %101 = vmatprep.subr.bf16.mxu0 0
    %102 = vmatpush2.bf16.msra.mxu0 0
    %103 = vmatprep.mubr.bf16.mxu0 0
    %104 = vmatmul.mubr.bf16.gmra.mxu0 %v69
    %v105 = vpop.f32.mrf.mxu0
    %v106 = vadd.f32 %v53, %v105
    %v107 = vpop.f32.mrf.mxu0
    %v108 = vpop.f32.mrf.mxu0
    %v109 = vpop.f32.mrf.mxu0
    %110 = vdwg.mxu0
    %111 = vmax.xlane.f32.xlu0 %v106
    %v112 = vpop.xlane.xlu0 %111
    %v113 = vsub.f32 %v106, %v112
    %v114 = vmul.f32 %v113, 1.442695
    %v115 = vpow.pop %v114
    %116 = vadd.xlane.f32.xlu0 %v115
    %v117 = vpop.xlane.xlu0 %116
    %v118 = vrcp.pop %v117
    %v119 = vmul.f32 %v115, %v118
    %120 = vst [vmem:[#allocation7] sm:$0xff] %v119
    // Predicated region
    $region22: #{cbm_forward.1} parent=1 // pred_check
      _
    $region23: #{cbm_forward.1} parent=1 // pred_check_branch
      %122 = sbr.rel (0) target = $region25
    $region24: #{cbm_forward.1} parent=1 // pred_region
      %s124 = ssub.s32 128, 128
      %125 = vsyncadd [#allocation4], %s124
      %s127 = sshll.u32 [#allocation7], 4
      %s128 = int_to_ptr.vmem [resolvable:$true] %s127
      %130 = dma.vmem_to_hbm [thread:$0]  %s128, 128, %s3, [#allocation4]
    $region25: #{cbm_forward.1} parent=1 // pred_fallthru
      _
    // Predicated region
    $region26: #{cbm_forward.1} parent=1 // pred_check
      _
    $region27: #{cbm_forward.1} parent=1 // pred_check_branch
      %132 = sbr.rel (0) target = $region29
    $region28: #{cbm_forward.1} parent=1 // pred_region
      %133 = dma.done [#allocation4], 128
    $region29: #{cbm_forward.1} parent=1 // pred_fallthru
      _
    %134 = vsyncpa [#allocation3], 1
    %135 = vsyncpa [#allocation6], 1
    %136 = vsyncpa [#allocation4], 1

</llo_original>
